<compile_context>
chip_gen: v6e
topology: v6e:2x2x1
jax: 0.10.0
libtpu: 0.0.40
codegen_flags: <defaults>
</compile_context>

<pallas_src>
import functools

import jax
import jax.numpy as jnp
from jax.experimental import pallas as pl
from jax.experimental.pallas import tpu as pltpu

_LANE = 128
_SUBLANE = 8


def _round_up(x, m):
    return ((x + m - 1) // m) * m


# ----------------------------------------------------------------------------
# Kernel
# ----------------------------------------------------------------------------
def cnf_rk4_kernel(t_ref, x_ref, w1_ref, b1_ref, wt_ref, w2_ref, b2_ref,
                   o_ref, xw_ref, *, bf16_tanh):
    """One torchdiffeq-style RK4 (3/8 rule) step of the CNF ODE.

    Refs:
      t_ref : (2,)      f32 SMEM   -- [t0, t1]
      x_ref : (TB, D)   f32 VMEM   -- tight state tile (no lane padding in HBM)
      w1_ref: (Dp, Hp)  bf16       -- resident across the batch grid
      b1_ref: (1,  Hp)  f32
      wt_ref: (1,  Hp)  f32        -- time-conditioning vector
      w2_ref: (Hp, Dp)  bf16       -- padded output columns are zero
      b2_ref: (1,  Dp)  f32        -- padded lanes are zero
      o_ref : (TB, D)              -- tight output tile
      xw_ref: (TB, Dp)  f32 scratch -- lane-padded working copy of the state
    """
    d = o_ref.shape[-1]

    t0 = t_ref[0]
    t1 = t_ref[1]
    h = t1 - t0

    # Widen the tight (TB, D) state tile to lane-padded (TB, Dp) once per grid
    # step.  Padded lanes are zero and remain zero through every RK stage
    # (w2/b2 padding is zero), so this is the only widen needed and no
    # Dp-padded tensor ever touches HBM.
    xw_ref[...] = jnp.zeros_like(xw_ref)
    xw_ref[:, :d] = x_ref[...].astype(jnp.float32)
    x = xw_ref[...]

    w1 = w1_ref[...]
    b1 = b1_ref[...]
    wt = wt_ref[...]
    w2 = w2_ref[...]
    b2 = b2_ref[...]

    def vector_field(t, y):
        # bf16 MXU operands, f32 accumulation.
        pre = jnp.dot(y.astype(jnp.bfloat16), w1,
                      preferred_element_type=jnp.float32)
        pre = pre + (b1 + t * wt)          # b1 folded into the (1,Hp) time add
        if bf16_tanh:
            # v6e/v7x: bf16 EUP tanh -> half the transcendental pushes and no
            # separate act cast before the second matmul.
            act = jnp.tanh(pre.astype(jnp.bfloat16))
        else:
            # v5e and older: no bf16 EUP; tanh in f32, cast for the MXU.
            act = jnp.tanh(pre).astype(jnp.bfloat16)
        return jnp.dot(act, w2, preferred_element_type=jnp.float32) + b2

    third = 1.0 / 3.0
    # Incremental accumulation keeps the live set / vst traffic small.
    k1 = vector_field(t0, x)
    acc = x + (h * 0.125) * k1
    k2 = vector_field(t0 + h * third, x + (h * third) * k1)
    acc = acc + (h * 0.375) * k2
    k3 = vector_field(t0 + h * (2.0 * third), x + h * (k2 - k1 * third))
    acc = acc + (h * 0.375) * k3
    k4 = vector_field(t1, x + h * (k1 - k2 + k3))
    acc = acc + (h * 0.125) * k4

    # Write back only the tight (TB, D) slice (round-trip through the scratch
    # so the narrow slice is a plain ref-slice load + masked store).
    xw_ref[...] = acc
    o_ref[...] = xw_ref[:, :d].astype(o_ref.dtype)


# ----------------------------------------------------------------------------
# Parameter preparation (done ONCE at init, not per forward call)
# ----------------------------------------------------------------------------
def make_cnf_params(w1, b1, wt, w2, b2):
    """Pad / cast the vector-field weights to MXU-tile-aligned bf16 layout."""
    D, H = w1.shape
    Dp = _round_up(D, _LANE)
    Hp = _round_up(H, _LANE)
    # Note: for large D/H (>=128) on v6e/v7x, 256-alignment would fill the
    # 2x256x256 MXU; moot at these sizes.

    w1p = jnp.zeros((Dp, Hp), jnp.float32).at[:D, :H].set(w1).astype(jnp.bfloat16)
    b1p = jnp.zeros((1, Hp), jnp.float32).at[:, :H].set(b1.reshape(1, H))
    wtp = jnp.zeros((1, Hp), jnp.float32).at[:, :H].set(wt.reshape(1, H))
    # Padded output columns of w2p / padded lanes of b2p are zero -> padded
    # lanes of the RK state stay exactly zero across all stages (kernel invariant).
    w2p = jnp.zeros((Hp, Dp), jnp.float32).at[:H, :D].set(w2).astype(jnp.bfloat16)
    b2p = jnp.zeros((1, Dp), jnp.float32).at[:, :D].set(b2.reshape(1, D))

    return dict(w1=w1p, b1=b1p, wt=wtp, w2=w2p, b2=b2p, D=D, H=H, Dp=Dp, Hp=Hp)


def _choose_batch_tile(B, max_batch_tile):
    """Largest batch tile <= max_batch_tile with >= 2 grid steps when B >= 16."""
    B8 = _round_up(B, _SUBLANE)
    if B8 <= _SUBLANE:
        return B8
    half = _round_up(B8 // 2, _SUBLANE)   # guarantees >=2 steps (v7x megacore)
    return min(max_batch_tile, half)


def _default_bf16_tanh():
    kind = jax.devices()[0].device_kind.lower()
    return not any(v in kind for v in ("v2", "v3", "v4", "v5"))


# ----------------------------------------------------------------------------
# Forward wrapper
# ----------------------------------------------------------------------------
def cnf_forward(x0, t_span, params, *, max_batch_tile=512, bf16_tanh=None):
    if bf16_tanh is None:
        bf16_tanh = _default_bf16_tanh()

    B, D = x0.shape
    assert D == params["D"], "x0 feature dim must match vector-field weights"
    Dp, Hp = params["Dp"], params["Hp"]

    TB = _choose_batch_tile(B, max_batch_tile)
    Bp = _round_up(B, TB)
    if Bp != B:                               # only pad batch when needed
        x_in = jnp.zeros((Bp, D), x0.dtype).at[:B].set(x0)
    else:
        x_in = x0

    grid = (Bp // TB,)
    t_span = t_span.astype(jnp.float32)

    flops = 4 * (2 * Bp * Dp * Hp + 2 * Bp * Hp * Dp)   # 4 stages x 2 matmuls
    transcendentals = 4 * Bp * Hp
    bytes_accessed = (Bp * D * 4 * 2                    # x in + out (tight, not Dp-padded)
                      + params["w1"].size * 2 + params["w2"].size * 2
                      + params["b1"].size * 4 + params["wt"].size * 4
                      + params["b2"].size * 4 + 8)

    kernel = functools.partial(cnf_rk4_kernel, bf16_tanh=bf16_tanh)

    out = pl.pallas_call(
        kernel,
        out_shape=jax.ShapeDtypeStruct((Bp, D), x0.dtype),
        grid=grid,
        in_specs=[
            pl.BlockSpec(memory_space=pltpu.MemorySpace.SMEM),  # t_span scalars
            pl.BlockSpec((TB, D), lambda i: (i, 0)),            # tight x batch tile
            pl.BlockSpec((Dp, Hp), lambda i: (0, 0)),           # W1, resident
            pl.BlockSpec((1, Hp), lambda i: (0, 0)),            # b1, resident
            pl.BlockSpec((1, Hp), lambda i: (0, 0)),            # wt, resident
            pl.BlockSpec((Hp, Dp), lambda i: (0, 0)),           # W2, resident
            pl.BlockSpec((1, Dp), lambda i: (0, 0)),            # b2, resident
        ],
        out_specs=pl.BlockSpec((TB, D), lambda i: (i, 0)),      # tight output tile
        scratch_shapes=[pltpu.VMEM((TB, Dp), jnp.float32)],     # widened state
        compiler_params=pltpu.CompilerParams(
            dimension_semantics=("parallel",)),                 # shard batch across TCs
        cost_estimate=pl.CostEstimate(
            flops=flops, transcendentals=transcendentals,
            bytes_accessed=bytes_accessed),
    )(t_span, x_in, params["w1"], params["b1"], params["wt"],
      params["w2"], params["b2"])

    if Bp != B:
        out = out[:B]
    return out


# ----------------------------------------------------------------------------
# Pure-JAX references
# ----------------------------------------------------------------------------
def _rk4_38_step(f, y0, t0, t1):
    h = t1 - t0
    k1 = f(t0, y0)
    k2 = f(t0 + h / 3.0, y0 + h * k1 / 3.0)
    k3 = f(t0 + 2.0 * h / 3.0, y0 + h * (k2 - k1 / 3.0))
    k4 = f(t1, y0 + h * (k1 - k2 + k3))
    return y0 + h * 0.125 * (k1 + 3.0 * (k2 + k3) + k4)


def cnf_reference_f32(x0, t_span, w1, b1, wt, w2, b2):
    """Exact f32 semantics of the original module (one RK4 3/8-rule step)."""
    def f(t, y):
        return jnp.tanh(y @ w1 + b1 + t * wt) @ w2 + b2
    return _rk4_38_step(f, x0, t_span[0], t_span[1])


def cnf_reference_kernel_math(x0, t_span, params, bf16_tanh):
    """Plain-JAX replica of the kernel's exact padded / bf16-operand math."""
    B, D = x0.shape
    Dp = params["Dp"]
    w1, b1, wt, w2, b2 = (params[k] for k in ("w1", "b1", "wt", "w2", "b2"))
    x = jnp.zeros((B, Dp), jnp.float32).at[:, :D].set(x0.astype(jnp.float32))

    def f(t, y):
        pre = jnp.dot(y.astype(jnp.bfloat16), w1,
                      preferred_element_type=jnp.float32)
        pre = pre + (b1 + t * wt)
        if bf16_tanh:
            act = jnp.tanh(pre.astype(jnp.bfloat16))
        else:
            act = jnp.tanh(pre).astype(jnp.bfloat16)
        return jnp.dot(act, w2, preferred_element_type=jnp.float32) + b2

    t0 = t_span[0]
    t1 = t_span[1]
    h = t1 - t0
    third = 1.0 / 3.0
    k1 = f(t0, x)
    acc = x + (h * 0.125) * k1
    k2 = f(t0 + h * third, x + (h * third) * k1)
    acc = acc + (h * 0.375) * k2
    k3 = f(t0 + h * (2.0 * third), x + h * (k2 - k1 * third))
    acc = acc + (h * 0.375) * k3
    k4 = f(t1, x + h * (k1 - k2 + k3))
    acc = acc + (h * 0.125) * k4
    return acc[:, :D]


# ----------------------------------------------------------------------------
if __name__ == "__main__":
    B, D, H = 8, 16, 32  # small shapes: batch=8, data dim=16, hidden=32

    key = jax.random.PRNGKey(0)
    kx, kk1, kk2, kk3, kk4, kk5 = jax.random.split(key, 6)

    x0 = jax.random.normal(kx, (B, D), dtype=jnp.float32)

    # Deterministic synthetic vector-field parameters.
    w1 = jax.random.normal(kk1, (D, H), dtype=jnp.float32) * 0.1
    b1 = jax.random.normal(kk2, (1, H), dtype=jnp.float32) * 0.1
    wt = jax.random.normal(kk3, (1, H), dtype=jnp.float32) * 0.1
    w2 = jax.random.normal(kk4, (H, D), dtype=jnp.float32) * 0.1
    b2 = jax.random.normal(kk5, (1, D), dtype=jnp.float32) * 0.1

    t_span = jnp.array([0.0, 1.0], dtype=jnp.float32)

    # Padded bf16 weights built once at init (not per forward call).
    params = make_cnf_params(w1, b1, wt, w2, b2)
    bf16_tanh = _default_bf16_tanh()

    out = jax.block_until_ready(
        cnf_forward(x0, t_span, params, bf16_tanh=bf16_tanh))
    assert out.shape == (B, D)

    # Tight check vs. a pure-JAX replica of the exact kernel math.
    ref_k = cnf_reference_kernel_math(x0, t_span, params, bf16_tanh)
    tight = 1e-2 if bf16_tanh else 1e-4
    assert jnp.allclose(out, ref_k, atol=tight, rtol=tight), \
        "mismatch vs kernel-math reference"

    # Loose sanity check vs. the full-f32 module semantics.
    ref_f32 = cnf_reference_f32(x0, t_span, w1, b1, wt, w2, b2)
    assert jnp.allclose(out, ref_f32, atol=5e-2, rtol=5e-2), \
        "mismatch vs f32 reference"

    # Exercise the multi-tile grid + batch-padding path (v7x 2-TC split).
    B2 = 40
    x0b = jax.random.normal(jax.random.PRNGKey(1), (B2, D), dtype=jnp.float32)
    out2 = jax.block_until_ready(
        cnf_forward(x0b, t_span, params, bf16_tanh=bf16_tanh))
    ref2 = cnf_reference_kernel_math(x0b, t_span, params, bf16_tanh)
    assert out2.shape == (B2, D)
    assert jnp.allclose(out2, ref2, atol=tight, rtol=tight), \
        "mismatch on multi-tile batch"

    print("KERNEL_OK")
</pallas_src>

<mosaic_0001>
module attributes {stable_mosaic.version = 11 : i64} {
  func.func @cnf_rk4_kernel(%arg0: i32, %arg1: memref<2xf32, #tpu.memory_space<smem>>, %arg2: memref<8x16xf32, #tpu.memory_space<vmem>>, %arg3: memref<128x128xbf16, #tpu.memory_space<vmem>>, %arg4: memref<1x128xf32, #tpu.memory_space<vmem>>, %arg5: memref<1x128xf32, #tpu.memory_space<vmem>>, %arg6: memref<128x128xbf16, #tpu.memory_space<vmem>>, %arg7: memref<1x128xf32, #tpu.memory_space<vmem>>, %arg8: memref<8x16xf32, #tpu.memory_space<vmem>>, %arg9: memref<8x128xf32, #tpu.memory_space<vmem>>) attributes {dimension_semantics = [#tpu.dimension_semantics<parallel>], iteration_bounds = array<i64: 1>, scalar_prefetch = 0 : i64, scratch_operands = 1 : i64, tpu.core_type = #tpu.core_type<tc>, window_params = [{transform_indices = @transform_0, window_bounds = array<i64: 2>}, {transform_indices = @transform_1, window_bounds = array<i64: 8, 16>}, {pipeline_mode = #tpu.pipeline_mode<synchronous>, transform_indices = @transform_2, window_bounds = array<i64: 128, 128>}, {pipeline_mode = #tpu.pipeline_mode<synchronous>, transform_indices = @transform_3, window_bounds = array<i64: 1, 128>}, {pipeline_mode = #tpu.pipeline_mode<synchronous>, transform_indices = @transform_4, window_bounds = array<i64: 1, 128>}, {pipeline_mode = #tpu.pipeline_mode<synchronous>, transform_indices = @transform_5, window_bounds = array<i64: 128, 128>}, {pipeline_mode = #tpu.pipeline_mode<synchronous>, transform_indices = @transform_6, window_bounds = array<i64: 1, 128>}, {transform_indices = @transform_7, window_bounds = array<i64: 8, 16>}]} {
    %c0 = arith.constant 0 : index
    %0 = memref.load %arg1[%c0] : memref<2xf32, #tpu.memory_space<smem>>
    %c1 = arith.constant 1 : index
    %1 = memref.load %arg1[%c1] : memref<2xf32, #tpu.memory_space<smem>>
    %2 = arith.subf %1, %0 : f32
    %cst = arith.constant 0.000000e+00 : f32
    %3 = vector.broadcast %cst : f32 to vector<8x128xf32>
    %c0_0 = arith.constant 0 : index
    %c0_1 = arith.constant 0 : index
    %4 = vector.load %arg9[%c0_0, %c0_1] : memref<8x128xf32, #tpu.memory_space<vmem>>, vector<8x128xf32>
    tpu.vector_store %arg9[%c0_0, %c0_1], %3 {strides = array<i32>} : memref<8x128xf32, #tpu.memory_space<vmem>>, vector<8x128xf32>,
    %c0_2 = arith.constant 0 : index
    %c0_3 = arith.constant 0 : index
    %5 = vector.load %arg2[%c0_2, %c0_3] : memref<8x16xf32, #tpu.memory_space<vmem>>, vector<8x16xf32>
    %c0_4 = arith.constant 0 : index
    %c0_5 = arith.constant 0 : index
    %6 = vector.load %arg9[%c0_4, %c0_5] : memref<8x128xf32, #tpu.memory_space<vmem>>, vector<8x16xf32>
    tpu.vector_store %arg9[%c0_4, %c0_5], %5 {strides = array<i32>} : memref<8x128xf32, #tpu.memory_space<vmem>>, vector<8x16xf32>,
    %c0_6 = arith.constant 0 : index
    %c0_7 = arith.constant 0 : index
    %7 = vector.load %arg9[%c0_6, %c0_7] : memref<8x128xf32, #tpu.memory_space<vmem>>, vector<8x128xf32>
    %c0_8 = arith.constant 0 : index
    %c0_9 = arith.constant 0 : index
    %8 = vector.load %arg3[%c0_8, %c0_9] : memref<128x128xbf16, #tpu.memory_space<vmem>>, vector<128x128xbf16>
    %c0_10 = arith.constant 0 : index
    %c0_11 = arith.constant 0 : index
    %9 = vector.load %arg4[%c0_10, %c0_11] : memref<1x128xf32, #tpu.memory_space<vmem>>, vector<1x128xf32>
    %c0_12 = arith.constant 0 : index
    %c0_13 = arith.constant 0 : index
    %10 = vector.load %arg5[%c0_12, %c0_13] : memref<1x128xf32, #tpu.memory_space<vmem>>, vector<1x128xf32>
    %c0_14 = arith.constant 0 : index
    %c0_15 = arith.constant 0 : index
    %11 = vector.load %arg6[%c0_14, %c0_15] : memref<128x128xbf16, #tpu.memory_space<vmem>>, vector<128x128xbf16>
    %c0_16 = arith.constant 0 : index
    %c0_17 = arith.constant 0 : index
    %12 = vector.load %arg7[%c0_16, %c0_17] : memref<1x128xf32, #tpu.memory_space<vmem>>, vector<1x128xf32>
    %13 = arith.truncf %7 : vector<8x128xf32> to vector<8x128xbf16>
    %cst_18 = arith.constant dense<0.000000e+00> : vector<8x128xf32>
    %14 = tpu.matmul %13, %8, %cst_18 {dimension_numbers = #tpu.dot_dimension_numbers<[1], [0], [0], [1], [0, 0, 1, 1], [], []>} : vector<8x128xbf16>, vector<128x128xbf16>, vector<8x128xf32> -> vector<8x128xf32>
    %15 = vector.broadcast %0 : f32 to vector<1x128xf32>
    %16 = arith.mulf %15, %10 : vector<1x128xf32>
    %17 = arith.addf %9, %16 : vector<1x128xf32>
    %18 = vector.broadcast %17 : vector<1x128xf32> to vector<8x128xf32>
    %19 = arith.addf %14, %18 : vector<8x128xf32>
    %20 = arith.truncf %19 : vector<8x128xf32> to vector<8x128xbf16>
    %21 = math.tanh %20 : vector<8x128xbf16>
    %cst_19 = arith.constant dense<0.000000e+00> : vector<8x128xf32>
    %22 = tpu.matmul %21, %11, %cst_19 {dimension_numbers = #tpu.dot_dimension_numbers<[1], [0], [0], [1], [0, 0, 1, 1], [], []>} : vector<8x128xbf16>, vector<128x128xbf16>, vector<8x128xf32> -> vector<8x128xf32>
    %23 = vector.broadcast %12 : vector<1x128xf32> to vector<8x128xf32>
    %24 = arith.addf %22, %23 : vector<8x128xf32>
    %cst_20 = arith.constant 1.250000e-01 : f32
    %25 = arith.mulf %2, %cst_20 : f32
    %26 = vector.broadcast %25 : f32 to vector<8x128xf32>
    %27 = arith.mulf %26, %24 : vector<8x128xf32>
    %28 = arith.addf %7, %27 : vector<8x128xf32>
    %cst_21 = arith.constant 0.333333343 : f32
    %29 = arith.mulf %2, %cst_21 : f32
    %30 = arith.addf %0, %29 : f32
    %cst_22 = arith.constant 0.333333343 : f32
    %31 = arith.mulf %2, %cst_22 : f32
    %32 = vector.broadcast %31 : f32 to vector<8x128xf32>
    %33 = arith.mulf %32, %24 : vector<8x128xf32>
    %34 = arith.addf %7, %33 : vector<8x128xf32>
    %35 = arith.truncf %34 : vector<8x128xf32> to vector<8x128xbf16>
    %cst_23 = arith.constant dense<0.000000e+00> : vector<8x128xf32>
    %36 = tpu.matmul %35, %8, %cst_23 {dimension_numbers = #tpu.dot_dimension_numbers<[1], [0], [0], [1], [0, 0, 1, 1], [], []>} : vector<8x128xbf16>, vector<128x128xbf16>, vector<8x128xf32> -> vector<8x128xf32>
    %37 = vector.broadcast %30 : f32 to vector<1x128xf32>
    %38 = arith.mulf %37, %10 : vector<1x128xf32>
    %39 = arith.addf %9, %38 : vector<1x128xf32>
    %40 = vector.broadcast %39 : vector<1x128xf32> to vector<8x128xf32>
    %41 = arith.addf %36, %40 : vector<8x128xf32>
    %42 = arith.truncf %41 : vector<8x128xf32> to vector<8x128xbf16>
    %43 = math.tanh %42 : vector<8x128xbf16>
    %cst_24 = arith.constant dense<0.000000e+00> : vector<8x128xf32>
    %44 = tpu.matmul %43, %11, %cst_24 {dimension_numbers = #tpu.dot_dimension_numbers<[1], [0], [0], [1], [0, 0, 1, 1], [], []>} : vector<8x128xbf16>, vector<128x128xbf16>, vector<8x128xf32> -> vector<8x128xf32>
    %45 = vector.broadcast %12 : vector<1x128xf32> to vector<8x128xf32>
    %46 = arith.addf %44, %45 : vector<8x128xf32>
    %cst_25 = arith.constant 3.750000e-01 : f32
    %47 = arith.mulf %2, %cst_25 : f32
    %48 = vector.broadcast %47 : f32 to vector<8x128xf32>
    %49 = arith.mulf %48, %46 : vector<8x128xf32>
    %50 = arith.addf %28, %49 : vector<8x128xf32>
    %cst_26 = arith.constant 0.666666686 : f32
    %51 = arith.mulf %2, %cst_26 : f32
    %52 = arith.addf %0, %51 : f32
    %cst_27 = arith.constant 0.333333343 : f32
    %53 = vector.broadcast %cst_27 : f32 to vector<8x128xf32>
    %54 = arith.mulf %24, %53 : vector<8x128xf32>
    %55 = arith.subf %46, %54 : vector<8x128xf32>
    %56 = vector.broadcast %2 : f32 to vector<8x128xf32>
    %57 = arith.mulf %56, %55 : vector<8x128xf32>
    %58 = arith.addf %7, %57 : vector<8x128xf32>
    %59 = arith.truncf %58 : vector<8x128xf32> to vector<8x128xbf16>
    %cst_28 = arith.constant dense<0.000000e+00> : vector<8x128xf32>
    %60 = tpu.matmul %59, %8, %cst_28 {dimension_numbers = #tpu.dot_dimension_numbers<[1], [0], [0], [1], [0, 0, 1, 1], [], []>} : vector<8x128xbf16>, vector<128x128xbf16>, vector<8x128xf32> -> vector<8x128xf32>
    %61 = vector.broadcast %52 : f32 to vector<1x128xf32>
    %62 = arith.mulf %61, %10 : vector<1x128xf32>
    %63 = arith.addf %9, %62 : vector<1x128xf32>
    %64 = vector.broadcast %63 : vector<1x128xf32> to vector<8x128xf32>
    %65 = arith.addf %60, %64 : vector<8x128xf32>
    %66 = arith.truncf %65 : vector<8x128xf32> to vector<8x128xbf16>
    %67 = math.tanh %66 : vector<8x128xbf16>
    %cst_29 = arith.constant dense<0.000000e+00> : vector<8x128xf32>
    %68 = tpu.matmul %67, %11, %cst_29 {dimension_numbers = #tpu.dot_dimension_numbers<[1], [0], [0], [1], [0, 0, 1, 1], [], []>} : vector<8x128xbf16>, vector<128x128xbf16>, vector<8x128xf32> -> vector<8x128xf32>
    %69 = vector.broadcast %12 : vector<1x128xf32> to vector<8x128xf32>
    %70 = arith.addf %68, %69 : vector<8x128xf32>
    %cst_30 = arith.constant 3.750000e-01 : f32
    %71 = arith.mulf %2, %cst_30 : f32
    %72 = vector.broadcast %71 : f32 to vector<8x128xf32>
    %73 = arith.mulf %72, %70 : vector<8x128xf32>
    %74 = arith.addf %50, %73 : vector<8x128xf32>
    %75 = arith.subf %24, %46 : vector<8x128xf32>
    %76 = arith.addf %75, %70 : vector<8x128xf32>
    %77 = vector.broadcast %2 : f32 to vector<8x128xf32>
    %78 = arith.mulf %77, %76 : vector<8x128xf32>
    %79 = arith.addf %7, %78 : vector<8x128xf32>
    %80 = arith.truncf %79 : vector<8x128xf32> to vector<8x128xbf16>
    %cst_31 = arith.constant dense<0.000000e+00> : vector<8x128xf32>
    %81 = tpu.matmul %80, %8, %cst_31 {dimension_numbers = #tpu.dot_dimension_numbers<[1], [0], [0], [1], [0, 0, 1, 1], [], []>} : vector<8x128xbf16>, vector<128x128xbf16>, vector<8x128xf32> -> vector<8x128xf32>
    %82 = vector.broadcast %1 : f32 to vector<1x128xf32>
    %83 = arith.mulf %82, %10 : vector<1x128xf32>
    %84 = arith.addf %9, %83 : vector<1x128xf32>
    %85 = vector.broadcast %84 : vector<1x128xf32> to vector<8x128xf32>
    %86 = arith.addf %81, %85 : vector<8x128xf32>
    %87 = arith.truncf %86 : vector<8x128xf32> to vector<8x128xbf16>
    %88 = math.tanh %87 : vector<8x128xbf16>
    %cst_32 = arith.constant dense<0.000000e+00> : vector<8x128xf32>
    %89 = tpu.matmul %88, %11, %cst_32 {dimension_numbers = #tpu.dot_dimension_numbers<[1], [0], [0], [1], [0, 0, 1, 1], [], []>} : vector<8x128xbf16>, vector<128x128xbf16>, vector<8x128xf32> -> vector<8x128xf32>
    %90 = vector.broadcast %12 : vector<1x128xf32> to vector<8x128xf32>
    %91 = arith.addf %89, %90 : vector<8x128xf32>
    %cst_33 = arith.constant 1.250000e-01 : f32
    %92 = arith.mulf %2, %cst_33 : f32
    %93 = vector.broadcast %92 : f32 to vector<8x128xf32>
    %94 = arith.mulf %93, %91 : vector<8x128xf32>
    %95 = arith.addf %74, %94 : vector<8x128xf32>
    %c0_34 = arith.constant 0 : index
    %c0_35 = arith.constant 0 : index
    %96 = vector.load %arg9[%c0_34, %c0_35] : memref<8x128xf32, #tpu.memory_space<vmem>>, vector<8x128xf32>
    tpu.vector_store %arg9[%c0_34, %c0_35], %95 {strides = array<i32>} : memref<8x128xf32, #tpu.memory_space<vmem>>, vector<8x128xf32>,
    %c0_36 = arith.constant 0 : index
    %c0_37 = arith.constant 0 : index
    %97 = vector.load %arg9[%c0_36, %c0_37] : memref<8x128xf32, #tpu.memory_space<vmem>>, vector<8x16xf32>
    %c0_38 = arith.constant 0 : index
    %c0_39 = arith.constant 0 : index
    %98 = vector.load %arg8[%c0_38, %c0_39] : memref<8x16xf32, #tpu.memory_space<vmem>>, vector<8x16xf32>
    tpu.vector_store %arg8[%c0_38, %c0_39], %97 {strides = array<i32>} : memref<8x16xf32, #tpu.memory_space<vmem>>, vector<8x16xf32>,
    return
  }
  func.func @transform_0(%arg0: i32) -> i32 {
    %c0_i32 = arith.constant 0 : i32
    %c0_i32_0 = arith.constant 0 : i32
    return %c0_i32 : i32
  }
  func.func @transform_1(%arg0: i32) -> (i32, i32) {
    %c0_i32 = arith.constant 0 : i32
    %c0_i32_0 = arith.constant 0 : i32
    return %arg0, %c0_i32 : i32, i32
  }
  func.func @transform_2(%arg0: i32) -> (i32, i32) {
    %c0_i32 = arith.constant 0 : i32
    %c0_i32_0 = arith.constant 0 : i32
    %c0_i32_1 = arith.constant 0 : i32
    return %c0_i32, %c0_i32_0 : i32, i32
  }
  func.func @transform_3(%arg0: i32) -> (i32, i32) {
    %c0_i32 = arith.constant 0 : i32
    %c0_i32_0 = arith.constant 0 : i32
    %c0_i32_1 = arith.constant 0 : i32
    return %c0_i32, %c0_i32_0 : i32, i32
  }
  func.func @transform_4(%arg0: i32) -> (i32, i32) {
    %c0_i32 = arith.constant 0 : i32
    %c0_i32_0 = arith.constant 0 : i32
    %c0_i32_1 = arith.constant 0 : i32
    return %c0_i32, %c0_i32_0 : i32, i32
  }
  func.func @transform_5(%arg0: i32) -> (i32, i32) {
    %c0_i32 = arith.constant 0 : i32
    %c0_i32_0 = arith.constant 0 : i32
    %c0_i32_1 = arith.constant 0 : i32
    return %c0_i32, %c0_i32_0 : i32, i32
  }
  func.func @transform_6(%arg0: i32) -> (i32, i32) {
    %c0_i32 = arith.constant 0 : i32
    %c0_i32_0 = arith.constant 0 : i32
    %c0_i32_1 = arith.constant 0 : i32
    return %c0_i32, %c0_i32_0 : i32, i32
  }
  func.func @transform_7(%arg0: i32) -> (i32, i32) {
    %c0_i32 = arith.constant 0 : i32
    %c0_i32_0 = arith.constant 0 : i32
    return %arg0, %c0_i32 : i32, i32
  }
}

</mosaic_0001>

<llo_original>
// kernel: tpu_custom_call.1
$region0: #{tpu_custom_call.1}
  #allocation0 [shape = 'u32[]', space=smem, size = 0x4, offset = 0x4, fixed_abs, tag = 'smem constant byte address 0x4 - core index']
  #allocation1 [shape = 'u32[144,128]{1,0:T(1,128)}', space=vmem, size = 0x12000, scoped, tag = 'internal scratch']
  #allocation2 [shape = 'f32[8,128]{1,0:T(8,128)}', space=vmem, size = 0x1000, scoped, tag = 'scratch operand']
  %s0 = inlined_call_operand.hbm [shape: f32[2], index: 0, kind: input, shape index: {}]
  %s1 = inlined_call_operand.hbm [shape: f32[8,16], index: 1, kind: input, shape index: {}]
  %s2 = inlined_call_operand.hbm [shape: bf16[128,128], index: 2, kind: input, shape index: {}]
  %s3 = inlined_call_operand.vmem [shape: f32[1,128], index: 3, kind: input, shape index: {}]
  %s4 = inlined_call_operand.vmem [shape: f32[1,128], index: 4, kind: input, shape index: {}]
  %s5 = inlined_call_operand.hbm [shape: bf16[128,128], index: 5, kind: input, shape index: {}]
  %s6 = inlined_call_operand.vmem [shape: f32[1,128], index: 6, kind: input, shape index: {}]
  %s7 = inlined_call_operand.hbm [shape: f32[8,16], index: 7, kind: output, shape index: {}]
  %s8 = sld [smem:[#allocation0]]
  $region54: #{tpu_custom_call.1} parent=0
    _
  %s10 = ssub.s32 1, %s8
  %s11 = scalar_select 0, %s10, %s8
  $region1: #{tpu_custom_call.1} parent=0
    #allocation3 [shape = 'u8[512]{0}', space=smem, size = 0x200, scoped, tag = 'input window, operand 0, single buffered']
    #allocation4 [shape = 's32[1]{0}', space=sflag, size = 0x4, scoped, tag = 'scoped memory for tpu_custom_call.1']
    #allocation5 [shape = 's32[1]{0}', space=sflag, size = 0x4, scoped, tag = 'scoped memory for tpu_custom_call.1']
    #allocation6 [shape = 's32[1]{0}', space=sflag, size = 0x4, scoped, tag = 'scoped memory for tpu_custom_call.1']
    #allocation7 [shape = 'u8[4096]{0}', space=vmem, size = 0x1000, scoped, tag = 'input window, operand 1, single buffered']
    #allocation8 [shape = 'u8[32768]{0}', space=vmem, size = 0x8000, scoped, tag = 'input window, operand 2, single buffered']
    #allocation9 [shape = 's32[1]{0}', space=sflag, size = 0x4, scoped, tag = 'scoped memory for tpu_custom_call.1']
    #allocation10 [shape = 'u8[32768]{0}', space=vmem, size = 0x8000, scoped, tag = 'input window, operand 5, single buffered']
    #allocation11 [shape = 'u8[4096]{0}', space=vmem, size = 0x1000, scoped, tag = 'output window, operand 0, single buffered']
    %12 = vsyncpa [#allocation6], 0
    %13 = vsyncpa [#allocation4], 0
    %14 = vsyncpa [#allocation9], 0
    %15 = vsyncpa [#allocation5], 0
    // Predicated region
    $region2: #{tpu_custom_call.1} parent=1 // pred_check
      _
    $region3: #{tpu_custom_call.1} parent=1 // pred_check_branch
      %17 = sbr.rel (0) target = $region5
    $region4: #{tpu_custom_call.1} parent=1 // pred_region
      %s19 = ssub.s32 16, 16
      %20 = vsyncadd [#allocation6], %s19
      %23 = dma.hbm_to_smem %s0, 16, [#allocation3], [#allocation6]
    $region5: #{tpu_custom_call.1} parent=1 // pred_fallthru
      _
    // Predicated region
    $region6: #{tpu_custom_call.1} parent=1 // pred_check
      _
    $region7: #{tpu_custom_call.1} parent=1 // pred_check_branch
      %25 = sbr.rel (0) target = $region9
    $region8: #{tpu_custom_call.1} parent=1 // pred_region
      %s27 = ssub.s32 128, 128
      %28 = vsyncadd [#allocation4], %s27
      %s30 = sshll.u32 [#allocation7], 4
      %s31 = int_to_ptr.vmem [resolvable:$true] %s30
      %33 = dma.hbm_to_vmem [thread:$0]  %s1, 128, %s31, [#allocation4]
    $region9: #{tpu_custom_call.1} parent=1 // pred_fallthru
      _
    // Predicated region
    $region10: #{tpu_custom_call.1} parent=1 // pred_check
      _
    $region11: #{tpu_custom_call.1} parent=1 // pred_check_branch
      %35 = sbr.rel (0) target = $region13
    $region12: #{tpu_custom_call.1} parent=1 // pred_region
      %s37 = ssub.s32 1024, 1024
      %38 = vsyncadd [#allocation9], %s37
      %s39 = sshll.u32 [#allocation8], 4
      %s40 = int_to_ptr.vmem [resolvable:$true] %s39
      %45 = dma.hbm_to_vmem [thread:$0]  %s2, 1024, %s40, [#allocation9], 64, 64, 4
    $region13: #{tpu_custom_call.1} parent=1 // pred_fallthru
      _
    // Predicated region
    $region14: #{tpu_custom_call.1} parent=1 // pred_check
      _
    $region15: #{tpu_custom_call.1} parent=1 // pred_check_branch
      %47 = sbr.rel (0) target = $region17
    $region16: #{tpu_custom_call.1} parent=1 // pred_region
      _
    $region17: #{tpu_custom_call.1} parent=1 // pred_fallthru
      _
    // Predicated region
    $region18: #{tpu_custom_call.1} parent=1 // pred_check
      _
    $region19: #{tpu_custom_call.1} parent=1 // pred_check_branch
      %49 = sbr.rel (0) target = $region21
    $region20: #{tpu_custom_call.1} parent=1 // pred_region
      _
    $region21: #{tpu_custom_call.1} parent=1 // pred_fallthru
      _
    // Predicated region
    $region22: #{tpu_custom_call.1} parent=1 // pred_check
      _
    $region23: #{tpu_custom_call.1} parent=1 // pred_check_branch
      %51 = sbr.rel (0) target = $region25
    $region24: #{tpu_custom_call.1} parent=1 // pred_region
      %s53 = ssub.s32 1024, 1024
      %54 = vsyncadd [#allocation9], %s53
      %s55 = sshll.u32 [#allocation10], 4
      %s56 = int_to_ptr.vmem [resolvable:$true] %s55
      %61 = dma.hbm_to_vmem [thread:$0]  %s5, 1024, %s56, [#allocation9], 64, 64, 4
    $region25: #{tpu_custom_call.1} parent=1 // pred_fallthru
      _
    // Predicated region
    $region26: #{tpu_custom_call.1} parent=1 // pred_check
      _
    $region27: #{tpu_custom_call.1} parent=1 // pred_check_branch
      %63 = sbr.rel (0) target = $region29
    $region28: #{tpu_custom_call.1} parent=1 // pred_region
      _
    $region29: #{tpu_custom_call.1} parent=1 // pred_fallthru
      _
    // Predicated region
    $region30: #{tpu_custom_call.1} parent=1 // pred_check
      _
    $region31: #{tpu_custom_call.1} parent=1 // pred_check_branch
      %65 = sbr.rel (0) target = $region33
    $region32: #{tpu_custom_call.1} parent=1 // pred_region
      %66 = dma.done [#allocation6], 16
    $region33: #{tpu_custom_call.1} parent=1 // pred_fallthru
      _
    // Predicated region
    $region34: #{tpu_custom_call.1} parent=1 // pred_check
      _
    $region35: #{tpu_custom_call.1} parent=1 // pred_check_branch
      %68 = sbr.rel (0) target = $region37
    $region36: #{tpu_custom_call.1} parent=1 // pred_region
      %69 = dma.done [#allocation4], 128
    $region37: #{tpu_custom_call.1} parent=1 // pred_fallthru
      _
    // Predicated region
    $region38: #{tpu_custom_call.1} parent=1 // pred_check
      _
    $region39: #{tpu_custom_call.1} parent=1 // pred_check_branch
      %71 = sbr.rel (0) target = $region41
    $region40: #{tpu_custom_call.1} parent=1 // pred_region
      %72 = dma.done [#allocation9], 1024
    $region41: #{tpu_custom_call.1} parent=1 // pred_fallthru
      _
    // Predicated region
    $region42: #{tpu_custom_call.1} parent=1 // pred_check
      _
    $region43: #{tpu_custom_call.1} parent=1 // pred_check_branch
      %74 = sbr.rel (0) target = $region45
    $region44: #{tpu_custom_call.1} parent=1 // pred_region
      %75 = dma.done [#allocation9], 1024
    $region45: #{tpu_custom_call.1} parent=1 // pred_fallthru
      _
    %76 = sfence
    %s78 = sld [smem:[#allocation3]]
    %s79 = sld [smem:[#allocation3 + $0x1]]
    %s80 = ssub.f32 %s79, %s78
    %81 = vst [vmem:[#allocation2] sm:$0xff] 0.0
    %v82 = vld [vmem:[#allocation7] sm:$0xff]
    %vm83 = vcmask 130048
    %84 = vst.msk [vmem:[#allocation2] sm:$0xff] %vm83, %v82
    %v85 = vld [vmem:[#allocation2] sm:$0xff]
    %v86 = vld [vmem:[#allocation8] sm:$0xf]
    %v87 = vld [vmem:[#allocation8 + $0x4] sm:$0xf]
    %v88 = vld [vmem:[#allocation8 + $0x8] sm:$0xf]
    %v89 = vld [vmem:[#allocation8 + $0xc] sm:$0xf]
    %v90 = vld [vmem:[#allocation8 + $0x10] sm:$0xf]
    %v91 = vld [vmem:[#allocation8 + $0x14] sm:$0xf]
    %v92 = vld [vmem:[#allocation8 + $0x18] sm:$0xf]
    %v93 = vld [vmem:[#allocation8 + $0x1c] sm:$0xf]
    %v94 = vld [vmem:[#allocation8 + $0x20] sm:$0xf]
    %v95 = vld [vmem:[#allocation8 + $0x24] sm:$0xf]
    %v96 = vld [vmem:[#allocation8 + $0x28] sm:$0xf]
    %v97 = vld [vmem:[#allocation8 + $0x2c] sm:$0xf]
    %v98 = vld [vmem:[#allocation8 + $0x30] sm:$0xf]
    %v99 = vld [vmem:[#allocation8 + $0x34] sm:$0xf]
    %v100 = vld [vmem:[#allocation8 + $0x38] sm:$0xf]
    %v101 = vld [vmem:[#allocation8 + $0x3c] sm:$0xf]
    %v102 = vld [vmem:[%s3] sm:$0x1]
    %v103 = vld [vmem:[%s4] sm:$0x1]
    %v104 = vld [vmem:[#allocation10] sm:$0xf]
    %v105 = vld [vmem:[#allocation10 + $0x4] sm:$0xf]
    %v106 = vld [vmem:[#allocation10 + $0x8] sm:$0xf]
    %v107 = vld [vmem:[#allocation10 + $0xc] sm:$0xf]
    %v108 = vld [vmem:[#allocation10 + $0x10] sm:$0xf]
    %v109 = vld [vmem:[#allocation10 + $0x14] sm:$0xf]
    %v110 = vld [vmem:[#allocation10 + $0x18] sm:$0xf]
    %v111 = vld [vmem:[#allocation10 + $0x1c] sm:$0xf]
    %v112 = vld [vmem:[#allocation10 + $0x20] sm:$0xf]
    %v113 = vld [vmem:[#allocation10 + $0x24] sm:$0xf]
    %v114 = vld [vmem:[#allocation10 + $0x28] sm:$0xf]
    %v115 = vld [vmem:[#allocation10 + $0x2c] sm:$0xf]
    %v116 = vld [vmem:[#allocation10 + $0x30] sm:$0xf]
    %v117 = vld [vmem:[#allocation10 + $0x34] sm:$0xf]
    %v118 = vld [vmem:[#allocation10 + $0x38] sm:$0xf]
    %v119 = vld [vmem:[#allocation10 + $0x3c] sm:$0xf]
    %v120 = vld [vmem:[%s6] sm:$0x1]
    %v121 = vpack.c.bf16 %v85, %v85
    %v122 = vstv %s78
    %v123 = vmul.f32 %v122, %v103
    %v124 = vadd.f32 %v102, %v123
    %v126 = vlaneseq
    %v127 = vshrl.u32 %v126, 7
    %v128 = vsub.s32 0, %v127
    %v129 = vrot.slane %v124, %v128
    %v147 = vunpack.c.l.b16 %v86
    %v148 = vunpack.c.l.b16 %v87
    %v149 = vunpack.c.l.b16 %v88
    %v150 = vunpack.c.l.b16 %v89
    %v151 = vunpack.c.l.b16 %v90
    %v152 = vunpack.c.l.b16 %v91
    %v153 = vunpack.c.l.b16 %v92
    %v154 = vunpack.c.l.b16 %v93
    %v155 = vunpack.c.l.b16 %v94
    %v156 = vunpack.c.l.b16 %v95
    %v157 = vunpack.c.l.b16 %v96
    %v158 = vunpack.c.l.b16 %v97
    %v159 = vunpack.c.l.b16 %v98
    %v160 = vunpack.c.l.b16 %v99
    %v161 = vunpack.c.l.b16 %v100
    %v162 = vunpack.c.l.b16 %v101
    %v163 = vpack.c.b16 %v148, %v147
    %v164 = vpack.c.b16 %v150, %v149
    %v165 = vpack.c.b16 %v152, %v151
    %v166 = vpack.c.b16 %v154, %v153
    %v167 = vpack.c.b16 %v156, %v155
    %v168 = vpack.c.b16 %v158, %v157
    %v169 = vpack.c.b16 %v160, %v159
    %v170 = vpack.c.b16 %v162, %v161
    %179 = vmatprep.subr.bf16.mxu0 0
    %180 = vmatpush1.bf16.msra.mxu0 %v170
    %181 = vmatprep.subr.bf16.mxu0 0
    %182 = vmatpush1.bf16.msra.mxu0 %v169
    %183 = vmatprep.subr.bf16.mxu0 0
    %184 = vmatpush1.bf16.msra.mxu0 %v168
    %185 = vmatprep.subr.bf16.mxu0 0
    %186 = vmatpush1.bf16.msra.mxu0 %v167
    %187 = vmatprep.subr.bf16.mxu0 0
    %188 = vmatpush1.bf16.msra.mxu0 %v166
    %189 = vmatprep.subr.bf16.mxu0 0
    %190 = vmatpush1.bf16.msra.mxu0 %v165
    %191 = vmatprep.subr.bf16.mxu0 0
    %192 = vmatpush1.bf16.msra.mxu0 %v164
    %193 = vmatprep.subr.bf16.mxu0 0
    %194 = vmatpush1.bf16.msra.mxu0 %v163
    %195 = vmatprep.subr.bf16.mxu0 0
    %196 = vmatpush2.bf16.msra.mxu0 0
    %197 = vmatprep.subr.bf16.mxu0 0
    %198 = vmatpush2.bf16.msra.mxu0 0
    %199 = vmatprep.subr.bf16.mxu0 0
    %200 = vmatpush2.bf16.msra.mxu0 0
    %201 = vmatprep.subr.bf16.mxu0 0
    %202 = vmatpush2.bf16.msra.mxu0 0
    %203 = vmatprep.subr.bf16.mxu0 0
    %204 = vmatpush2.bf16.msra.mxu0 0
    %205 = vmatprep.subr.bf16.mxu0 0
    %206 = vmatpush2.bf16.msra.mxu0 0
    %207 = vmatprep.subr.bf16.mxu0 0
    %208 = vmatpush2.bf16.msra.mxu0 0
    %209 = vmatprep.subr.bf16.mxu0 0
    %210 = vmatpush2.bf16.msra.mxu0 0
    %211 = vmatprep.mubr.bf16.mxu0 0
    %212 = vmatmul.mubr.bf16.gmra.mxu0 %v121
    %v213 = vpop.f32.mrf.mxu0
    %v214 = vadd.f32 %v129, %v213
    %v215 = vpop.f32.mrf.mxu0
    %v216 = vpop.f32.mrf.mxu0
    %v217 = vpop.f32.mrf.mxu0
    %218 = vdwg.mxu0
    %v219 = vpack.c.bf16 %v214, %v214
    %v220 = vtanh.bf16.pop %v219
    %v222 = vlaneseq
    %v223 = vshrl.u32 %v222, 7
    %v224 = vsub.s32 0, %v223
    %v225 = vrot.slane %v120, %v224
    %v243 = vunpack.c.l.b16 %v104
    %v244 = vunpack.c.l.b16 %v105
    %v245 = vunpack.c.l.b16 %v106
    %v246 = vunpack.c.l.b16 %v107
    %v247 = vunpack.c.l.b16 %v108
    %v248 = vunpack.c.l.b16 %v109
    %v249 = vunpack.c.l.b16 %v110
    %v250 = vunpack.c.l.b16 %v111
    %v251 = vunpack.c.l.b16 %v112
    %v252 = vunpack.c.l.b16 %v113
    %v253 = vunpack.c.l.b16 %v114
    %v254 = vunpack.c.l.b16 %v115
    %v255 = vunpack.c.l.b16 %v116
    %v256 = vunpack.c.l.b16 %v117
    %v257 = vunpack.c.l.b16 %v118
    %v258 = vunpack.c.l.b16 %v119
    %v259 = vpack.c.b16 %v244, %v243
    %v260 = vpack.c.b16 %v246, %v245
    %v261 = vpack.c.b16 %v248, %v247
    %v262 = vpack.c.b16 %v250, %v249
    %v263 = vpack.c.b16 %v252, %v251
    %v264 = vpack.c.b16 %v254, %v253
    %v265 = vpack.c.b16 %v256, %v255
    %v266 = vpack.c.b16 %v258, %v257
    %275 = vmatprep.subr.bf16.mxu0 0
    %276 = vmatpush1.bf16.msra.mxu0 %v266
    %277 = vmatprep.subr.bf16.mxu0 0
    %278 = vmatpush1.bf16.msra.mxu0 %v265
    %279 = vmatprep.subr.bf16.mxu0 0
    %280 = vmatpush1.bf16.msra.mxu0 %v264
    %281 = vmatprep.subr.bf16.mxu0 0
    %282 = vmatpush1.bf16.msra.mxu0 %v263
    %283 = vmatprep.subr.bf16.mxu0 0
    %284 = vmatpush1.bf16.msra.mxu0 %v262
    %285 = vmatprep.subr.bf16.mxu0 0
    %286 = vmatpush1.bf16.msra.mxu0 %v261
    %287 = vmatprep.subr.bf16.mxu0 0
    %288 = vmatpush1.bf16.msra.mxu0 %v260
    %289 = vmatprep.subr.bf16.mxu0 0
    %290 = vmatpush1.bf16.msra.mxu0 %v259
    %291 = vmatprep.subr.bf16.mxu0 0
    %292 = vmatpush2.bf16.msra.mxu0 0
    %293 = vmatprep.subr.bf16.mxu0 0
    %294 = vmatpush2.bf16.msra.mxu0 0
    %295 = vmatprep.subr.bf16.mxu0 0
    %296 = vmatpush2.bf16.msra.mxu0 0
    %297 = vmatprep.subr.bf16.mxu0 0
    %298 = vmatpush2.bf16.msra.mxu0 0
    %299 = vmatprep.subr.bf16.mxu0 0
    %300 = vmatpush2.bf16.msra.mxu0 0
    %301 = vmatprep.subr.bf16.mxu0 0
    %302 = vmatpush2.bf16.msra.mxu0 0
    %303 = vmatprep.subr.bf16.mxu0 0
    %304 = vmatpush2.bf16.msra.mxu0 0
    %305 = vmatprep.subr.bf16.mxu0 0
    %306 = vmatpush2.bf16.msra.mxu0 0
    %307 = vmatprep.mubr.bf16.mxu0 0
    %308 = vmatmul.mubr.bf16.gmra.mxu0 %v220
    %v309 = vpop.f32.mrf.mxu0
    %v310 = vadd.f32 %v225, %v309
    %v311 = vpop.f32.mrf.mxu0
    %v312 = vpop.f32.mrf.mxu0
    %v313 = vpop.f32.mrf.mxu0
    %314 = vdwg.mxu0
    %s315 = smul.f32 %s80, 0.125
    %v316 = vstv %s315
    %v317 = vmul.f32 %v316, %v310
    %v318 = vadd.f32 %v85, %v317
    %s319 = smul.f32 %s80, 0.33333334
    %s320 = sadd.f32 %s78, %s319
    %v321 = vstv %s319
    %v322 = vmul.f32 %v321, %v310
    %v323 = vadd.f32 %v85, %v322
    %v324 = vpack.c.bf16 %v323, %v323
    %v325 = vstv %s320
    %v326 = vmul.f32 %v325, %v103
    %v327 = vadd.f32 %v102, %v326
    %v329 = vlaneseq
    %v330 = vshrl.u32 %v329, 7
    %v331 = vsub.s32 0, %v330
    %v332 = vrot.slane %v327, %v331
    %334 = vmatprep.subr.bf16.mxu0 0
    %335 = vmatpush1.bf16.msra.mxu0 %v170
    %336 = vmatprep.subr.bf16.mxu0 0
    %337 = vmatpush1.bf16.msra.mxu0 %v169
    %338 = vmatprep.subr.bf16.mxu0 0
    %339 = vmatpush1.bf16.msra.mxu0 %v168
    %340 = vmatprep.subr.bf16.mxu0 0
    %341 = vmatpush1.bf16.msra.mxu0 %v167
    %342 = vmatprep.subr.bf16.mxu0 0
    %343 = vmatpush1.bf16.msra.mxu0 %v166
    %344 = vmatprep.subr.bf16.mxu0 0
    %345 = vmatpush1.bf16.msra.mxu0 %v165
    %346 = vmatprep.subr.bf16.mxu0 0
    %347 = vmatpush1.bf16.msra.mxu0 %v164
    %348 = vmatprep.subr.bf16.mxu0 0
    %349 = vmatpush1.bf16.msra.mxu0 %v163
    %350 = vmatprep.subr.bf16.mxu0 0
    %351 = vmatpush2.bf16.msra.mxu0 0
    %352 = vmatprep.subr.bf16.mxu0 0
    %353 = vmatpush2.bf16.msra.mxu0 0
    %354 = vmatprep.subr.bf16.mxu0 0
    %355 = vmatpush2.bf16.msra.mxu0 0
    %356 = vmatprep.subr.bf16.mxu0 0
    %357 = vmatpush2.bf16.msra.mxu0 0
    %358 = vmatprep.subr.bf16.mxu0 0
    %359 = vmatpush2.bf16.msra.mxu0 0
    %360 = vmatprep.subr.bf16.mxu0 0
    %361 = vmatpush2.bf16.msra.mxu0 0
    %362 = vmatprep.subr.bf16.mxu0 0
    %363 = vmatpush2.bf16.msra.mxu0 0
    %364 = vmatprep.subr.bf16.mxu0 0
    %365 = vmatpush2.bf16.msra.mxu0 0
    %366 = vmatprep.mubr.bf16.mxu0 0
    %367 = vmatmul.mubr.bf16.gmra.mxu0 %v324
    %v368 = vpop.f32.mrf.mxu0
    %v369 = vadd.f32 %v332, %v368
    %v370 = vpop.f32.mrf.mxu0
    %v371 = vpop.f32.mrf.mxu0
    %v372 = vpop.f32.mrf.mxu0
    %373 = vdwg.mxu0
    %v374 = vpack.c.bf16 %v369, %v369
    %v375 = vtanh.bf16.pop %v374
    %376 = vmatprep.subr.bf16.mxu0 0
    %377 = vmatpush1.bf16.msra.mxu0 %v266
    %378 = vmatprep.subr.bf16.mxu0 0
    %379 = vmatpush1.bf16.msra.mxu0 %v265
    %380 = vmatprep.subr.bf16.mxu0 0
    %381 = vmatpush1.bf16.msra.mxu0 %v264
    %382 = vmatprep.subr.bf16.mxu0 0
    %383 = vmatpush1.bf16.msra.mxu0 %v263
    %384 = vmatprep.subr.bf16.mxu0 0
    %385 = vmatpush1.bf16.msra.mxu0 %v262
    %386 = vmatprep.subr.bf16.mxu0 0
    %387 = vmatpush1.bf16.msra.mxu0 %v261
    %388 = vmatprep.subr.bf16.mxu0 0
    %389 = vmatpush1.bf16.msra.mxu0 %v260
    %390 = vmatprep.subr.bf16.mxu0 0
    %391 = vmatpush1.bf16.msra.mxu0 %v259
    %392 = vmatprep.subr.bf16.mxu0 0
    %393 = vmatpush2.bf16.msra.mxu0 0
    %394 = vmatprep.subr.bf16.mxu0 0
    %395 = vmatpush2.bf16.msra.mxu0 0
    %396 = vmatprep.subr.bf16.mxu0 0
    %397 = vmatpush2.bf16.msra.mxu0 0
    %398 = vmatprep.subr.bf16.mxu0 0
    %399 = vmatpush2.bf16.msra.mxu0 0
    %400 = vmatprep.subr.bf16.mxu0 0
    %401 = vmatpush2.bf16.msra.mxu0 0
    %402 = vmatprep.subr.bf16.mxu0 0
    %403 = vmatpush2.bf16.msra.mxu0 0
    %404 = vmatprep.subr.bf16.mxu0 0
    %405 = vmatpush2.bf16.msra.mxu0 0
    %406 = vmatprep.subr.bf16.mxu0 0
    %407 = vmatpush2.bf16.msra.mxu0 0
    %408 = vmatprep.mubr.bf16.mxu0 0
    %409 = vmatmul.mubr.bf16.gmra.mxu0 %v375
    %v410 = vpop.f32.mrf.mxu0
    %v411 = vadd.f32 %v225, %v410
    %v412 = vpop.f32.mrf.mxu0
    %v413 = vpop.f32.mrf.mxu0
    %v414 = vpop.f32.mrf.mxu0
    %415 = vdwg.mxu0
    %s416 = smul.f32 %s80, 0.375
    %v417 = vstv %s416
    %v418 = vmul.f32 %v417, %v411
    %v419 = vadd.f32 %v318, %v418
    %s420 = smul.f32 %s80, 0.6666667
    %s421 = sadd.f32 %s78, %s420
    %v422 = vmul.f32 %v310, 0.33333334
    %v423 = vsub.f32 %v411, %v422
    %v424 = vstv %s80
    %v425 = vmul.f32 %v424, %v423
    %v426 = vadd.f32 %v85, %v425
    %v427 = vpack.c.bf16 %v426, %v426
    %v428 = vstv %s421
    %v429 = vmul.f32 %v428, %v103
    %v430 = vadd.f32 %v102, %v429
    %v432 = vlaneseq
    %v433 = vshrl.u32 %v432, 7
    %v434 = vsub.s32 0, %v433
    %v435 = vrot.slane %v430, %v434
    %437 = vmatprep.subr.bf16.mxu0 0
    %438 = vmatpush1.bf16.msra.mxu0 %v170
    %439 = vmatprep.subr.bf16.mxu0 0
    %440 = vmatpush1.bf16.msra.mxu0 %v169
    %441 = vmatprep.subr.bf16.mxu0 0
    %442 = vmatpush1.bf16.msra.mxu0 %v168
    %443 = vmatprep.subr.bf16.mxu0 0
    %444 = vmatpush1.bf16.msra.mxu0 %v167
    %445 = vmatprep.subr.bf16.mxu0 0
    %446 = vmatpush1.bf16.msra.mxu0 %v166
    %447 = vmatprep.subr.bf16.mxu0 0
    %448 = vmatpush1.bf16.msra.mxu0 %v165
    %449 = vmatprep.subr.bf16.mxu0 0
    %450 = vmatpush1.bf16.msra.mxu0 %v164
    %451 = vmatprep.subr.bf16.mxu0 0
    %452 = vmatpush1.bf16.msra.mxu0 %v163
    %453 = vmatprep.subr.bf16.mxu0 0
    %454 = vmatpush2.bf16.msra.mxu0 0
    %455 = vmatprep.subr.bf16.mxu0 0
    %456 = vmatpush2.bf16.msra.mxu0 0
    %457 = vmatprep.subr.bf16.mxu0 0
    %458 = vmatpush2.bf16.msra.mxu0 0
    %459 = vmatprep.subr.bf16.mxu0 0
    %460 = vmatpush2.bf16.msra.mxu0 0
    %461 = vmatprep.subr.bf16.mxu0 0
    %462 = vmatpush2.bf16.msra.mxu0 0
    %463 = vmatprep.subr.bf16.mxu0 0
    %464 = vmatpush2.bf16.msra.mxu0 0
    %465 = vmatprep.subr.bf16.mxu0 0
    %466 = vmatpush2.bf16.msra.mxu0 0
    %467 = vmatprep.subr.bf16.mxu0 0
    %468 = vmatpush2.bf16.msra.mxu0 0
    %469 = vmatprep.mubr.bf16.mxu0 0
    %470 = vmatmul.mubr.bf16.gmra.mxu0 %v427
    %v471 = vpop.f32.mrf.mxu0
    %v472 = vadd.f32 %v435, %v471
    %v473 = vpop.f32.mrf.mxu0
    %v474 = vpop.f32.mrf.mxu0
    %v475 = vpop.f32.mrf.mxu0
    %476 = vdwg.mxu0
    %v477 = vpack.c.bf16 %v472, %v472
    %v478 = vtanh.bf16.pop %v477
    %479 = vmatprep.subr.bf16.mxu0 0
    %480 = vmatpush1.bf16.msra.mxu0 %v266
    %481 = vmatprep.subr.bf16.mxu0 0
    %482 = vmatpush1.bf16.msra.mxu0 %v265
    %483 = vmatprep.subr.bf16.mxu0 0
    %484 = vmatpush1.bf16.msra.mxu0 %v264
    %485 = vmatprep.subr.bf16.mxu0 0
    %486 = vmatpush1.bf16.msra.mxu0 %v263
    %487 = vmatprep.subr.bf16.mxu0 0
    %488 = vmatpush1.bf16.msra.mxu0 %v262
    %489 = vmatprep.subr.bf16.mxu0 0
    %490 = vmatpush1.bf16.msra.mxu0 %v261
    %491 = vmatprep.subr.bf16.mxu0 0
    %492 = vmatpush1.bf16.msra.mxu0 %v260
    %493 = vmatprep.subr.bf16.mxu0 0
    %494 = vmatpush1.bf16.msra.mxu0 %v259
    %495 = vmatprep.subr.bf16.mxu0 0
    %496 = vmatpush2.bf16.msra.mxu0 0
    %497 = vmatprep.subr.bf16.mxu0 0
    %498 = vmatpush2.bf16.msra.mxu0 0
    %499 = vmatprep.subr.bf16.mxu0 0
    %500 = vmatpush2.bf16.msra.mxu0 0
    %501 = vmatprep.subr.bf16.mxu0 0
    %502 = vmatpush2.bf16.msra.mxu0 0
    %503 = vmatprep.subr.bf16.mxu0 0
    %504 = vmatpush2.bf16.msra.mxu0 0
    %505 = vmatprep.subr.bf16.mxu0 0
    %506 = vmatpush2.bf16.msra.mxu0 0
    %507 = vmatprep.subr.bf16.mxu0 0
    %508 = vmatpush2.bf16.msra.mxu0 0
    %509 = vmatprep.subr.bf16.mxu0 0
    %510 = vmatpush2.bf16.msra.mxu0 0
    %511 = vmatprep.mubr.bf16.mxu0 0
    %512 = vmatmul.mubr.bf16.gmra.mxu0 %v478
    %v513 = vpop.f32.mrf.mxu0
    %v514 = vadd.f32 %v225, %v513
    %v515 = vpop.f32.mrf.mxu0
    %v516 = vpop.f32.mrf.mxu0
    %v517 = vpop.f32.mrf.mxu0
    %518 = vdwg.mxu0
    %v519 = vmul.f32 %v417, %v514
    %v520 = vadd.f32 %v419, %v519
    %v521 = vsub.f32 %v310, %v411
    %v522 = vadd.f32 %v521, %v514
    %v523 = vmul.f32 %v424, %v522
    %v524 = vadd.f32 %v85, %v523
    %v525 = vpack.c.bf16 %v524, %v524
    %v526 = vstv %s79
    %v527 = vmul.f32 %v526, %v103
    %v528 = vadd.f32 %v102, %v527
    %v530 = vlaneseq
    %v531 = vshrl.u32 %v530, 7
    %v532 = vsub.s32 0, %v531
    %v533 = vrot.slane %v528, %v532
    %535 = vmatprep.subr.bf16.mxu0 0
    %536 = vmatpush1.bf16.msra.mxu0 %v170
    %537 = vmatprep.subr.bf16.mxu0 0
    %538 = vmatpush1.bf16.msra.mxu0 %v169
    %539 = vmatprep.subr.bf16.mxu0 0
    %540 = vmatpush1.bf16.msra.mxu0 %v168
    %541 = vmatprep.subr.bf16.mxu0 0
    %542 = vmatpush1.bf16.msra.mxu0 %v167
    %543 = vmatprep.subr.bf16.mxu0 0
    %544 = vmatpush1.bf16.msra.mxu0 %v166
    %545 = vmatprep.subr.bf16.mxu0 0
    %546 = vmatpush1.bf16.msra.mxu0 %v165
    %547 = vmatprep.subr.bf16.mxu0 0
    %548 = vmatpush1.bf16.msra.mxu0 %v164
    %549 = vmatprep.subr.bf16.mxu0 0
    %550 = vmatpush1.bf16.msra.mxu0 %v163
    %551 = vmatprep.subr.bf16.mxu0 0
    %552 = vmatpush2.bf16.msra.mxu0 0
    %553 = vmatprep.subr.bf16.mxu0 0
    %554 = vmatpush2.bf16.msra.mxu0 0
    %555 = vmatprep.subr.bf16.mxu0 0
    %556 = vmatpush2.bf16.msra.mxu0 0
    %557 = vmatprep.subr.bf16.mxu0 0
    %558 = vmatpush2.bf16.msra.mxu0 0
    %559 = vmatprep.subr.bf16.mxu0 0
    %560 = vmatpush2.bf16.msra.mxu0 0
    %561 = vmatprep.subr.bf16.mxu0 0
    %562 = vmatpush2.bf16.msra.mxu0 0
    %563 = vmatprep.subr.bf16.mxu0 0
    %564 = vmatpush2.bf16.msra.mxu0 0
    %565 = vmatprep.subr.bf16.mxu0 0
    %566 = vmatpush2.bf16.msra.mxu0 0
    %567 = vmatprep.mubr.bf16.mxu0 0
    %568 = vmatmul.mubr.bf16.gmra.mxu0 %v525
    %v569 = vpop.f32.mrf.mxu0
    %v570 = vadd.f32 %v533, %v569
    %v571 = vpop.f32.mrf.mxu0
    %v572 = vpop.f32.mrf.mxu0
    %v573 = vpop.f32.mrf.mxu0
    %574 = vdwg.mxu0
    %v575 = vpack.c.bf16 %v570, %v570
    %v576 = vtanh.bf16.pop %v575
    %577 = vmatprep.subr.bf16.mxu0 0
    %578 = vmatpush1.bf16.msra.mxu0 %v266
    %579 = vmatprep.subr.bf16.mxu0 0
    %580 = vmatpush1.bf16.msra.mxu0 %v265
    %581 = vmatprep.subr.bf16.mxu0 0
    %582 = vmatpush1.bf16.msra.mxu0 %v264
    %583 = vmatprep.subr.bf16.mxu0 0
    %584 = vmatpush1.bf16.msra.mxu0 %v263
    %585 = vmatprep.subr.bf16.mxu0 0
    %586 = vmatpush1.bf16.msra.mxu0 %v262
    %587 = vmatprep.subr.bf16.mxu0 0
    %588 = vmatpush1.bf16.msra.mxu0 %v261
    %589 = vmatprep.subr.bf16.mxu0 0
    %590 = vmatpush1.bf16.msra.mxu0 %v260
    %591 = vmatprep.subr.bf16.mxu0 0
    %592 = vmatpush1.bf16.msra.mxu0 %v259
    %593 = vmatprep.subr.bf16.mxu0 0
    %594 = vmatpush2.bf16.msra.mxu0 0
    %595 = vmatprep.subr.bf16.mxu0 0
    %596 = vmatpush2.bf16.msra.mxu0 0
    %597 = vmatprep.subr.bf16.mxu0 0
    %598 = vmatpush2.bf16.msra.mxu0 0
    %599 = vmatprep.subr.bf16.mxu0 0
    %600 = vmatpush2.bf16.msra.mxu0 0
    %601 = vmatprep.subr.bf16.mxu0 0
    %602 = vmatpush2.bf16.msra.mxu0 0
    %603 = vmatprep.subr.bf16.mxu0 0
    %604 = vmatpush2.bf16.msra.mxu0 0
    %605 = vmatprep.subr.bf16.mxu0 0
    %606 = vmatpush2.bf16.msra.mxu0 0
    %607 = vmatprep.subr.bf16.mxu0 0
    %608 = vmatpush2.bf16.msra.mxu0 0
    %609 = vmatprep.mubr.bf16.mxu0 0
    %610 = vmatmul.mubr.bf16.gmra.mxu0 %v576
    %v611 = vpop.f32.mrf.mxu0
    %v612 = vadd.f32 %v225, %v611
    %v613 = vpop.f32.mrf.mxu0
    %v614 = vpop.f32.mrf.mxu0
    %v615 = vpop.f32.mrf.mxu0
    %616 = vdwg.mxu0
    %v617 = vmul.f32 %v316, %v612
    %v618 = vadd.f32 %v520, %v617
    %619 = vst [vmem:[#allocation2] sm:$0xff] %v618
    %v620 = vld [vmem:[#allocation2] sm:$0xff]
    %621 = vst.msk [vmem:[#allocation11] sm:$0xff] %vm83, %v620
    // Predicated region
    $region46: #{tpu_custom_call.1} parent=1 // pred_check
      _
    $region47: #{tpu_custom_call.1} parent=1 // pred_check_branch
      %623 = sbr.rel (0) target = $region49
    $region48: #{tpu_custom_call.1} parent=1 // pred_region
      %s625 = ssub.s32 128, 128
      %626 = vsyncadd [#allocation5], %s625
      %s628 = sshll.u32 [#allocation11], 4
      %s629 = int_to_ptr.vmem [resolvable:$true] %s628
      %631 = dma.vmem_to_hbm [thread:$0]  %s629, 128, %s7, [#allocation5]
    $region49: #{tpu_custom_call.1} parent=1 // pred_fallthru
      _
    // Predicated region
    $region50: #{tpu_custom_call.1} parent=1 // pred_check
      _
    $region51: #{tpu_custom_call.1} parent=1 // pred_check_branch
      %633 = sbr.rel (0) target = $region53
    $region52: #{tpu_custom_call.1} parent=1 // pred_region
      %634 = dma.done [#allocation5], 128
    $region53: #{tpu_custom_call.1} parent=1 // pred_fallthru
      _
    %635 = vsyncpa [#allocation4], 1
    %636 = vsyncpa [#allocation9], 1
    %637 = vsyncpa [#allocation5], 1
    %638 = vsyncpa [#allocation6], 1

</llo_original>
